<compile_context>
chip_gen: v5e
topology: v5e:2x2
jax: 0.10.0
libtpu: 0.0.40
codegen_flags: <defaults>
</compile_context>

<pallas_src>
import functools

import jax
import jax.numpy as jnp
from jax.experimental import pallas as pl
from jax.experimental.pallas import tpu as pltpu

EPS = 1e-5         # BatchNorm1d default eps
_LANE = 128
_SUBLANE = 8


def _round_up(x, m):
    return (x + m - 1) // m * m


# --------------------------------------------------------------------------------------
# Kernels
# --------------------------------------------------------------------------------------

def _bn1_stats_kernel(x_ref, sum_ref, sq_ref):
    """Accumulate per-feature sum / sum-of-squares of x across the row grid."""
    @pl.when(pl.program_id(0) == 0)
    def _():
        sum_ref[...] = jnp.zeros_like(sum_ref)
        sq_ref[...] = jnp.zeros_like(sq_ref)

    x = x_ref[...].astype(jnp.float32)
    sum_ref[...] += jnp.sum(x, axis=0, keepdims=True)
    sq_ref[...] += jnp.sum(x * x, axis=0, keepdims=True)


def _fc1_stats_kernel(x_ref, scale1_ref, shift1_ref, w1_ref, b1_ref,
                      sum_ref, sq_ref, *, n_valid, n_padded):
    """Recompute h1 = fc1(relu(bn1(x))) per row tile and accumulate BN2 batch stats."""
    i = pl.program_id(0)

    @pl.when(i == 0)
    def _():
        sum_ref[...] = jnp.zeros_like(sum_ref)
        sq_ref[...] = jnp.zeros_like(sq_ref)

    x = x_ref[...].astype(jnp.float32)
    h = jnp.maximum(x * scale1_ref[...] + shift1_ref[...], 0.0)           # bn1 + relu (fused affine)
    h1 = jnp.dot(h.astype(jnp.bfloat16), w1_ref[...],
                 preferred_element_type=jnp.float32) + b1_ref[...]        # fc1 (bf16 MXU, f32 acc)

    if n_valid != n_padded:  # static: exclude zero-padded rows from the batch statistics
        tm = x_ref.shape[0]
        rows = i * tm + jax.lax.broadcasted_iota(jnp.int32, (tm, 1), 0)
        h1 = jnp.where(rows < n_valid, h1, 0.0)

    sum_ref[...] += jnp.sum(h1, axis=0, keepdims=True)
    sq_ref[...] += jnp.sum(h1 * h1, axis=0, keepdims=True)


def _apply_kernel(x_ref, scale1_ref, shift1_ref, w1_ref, b1_ref,
                  scale2_ref, shift2_ref, w2_ref, b2_ref, o_ref):
    """Full residual block per row tile (BN stats already folded into scale/shift)."""
    x = x_ref[...].astype(jnp.float32)
    h = jnp.maximum(x * scale1_ref[...] + shift1_ref[...], 0.0)           # bn1 + relu
    h1 = jnp.dot(h.astype(jnp.bfloat16), w1_ref[...],
                 preferred_element_type=jnp.float32) + b1_ref[...]        # fc1
    h2 = jnp.maximum(h1 * scale2_ref[...] + shift2_ref[...], 0.0)         # bn2 + relu
    # dropout(p=0.0) is the identity.
    r = jnp.dot(h2.astype(jnp.bfloat16), w2_ref[...],
                preferred_element_type=jnp.float32) + b2_ref[...]         # fc2
    o_ref[...] = (x + r).astype(o_ref.dtype)                              # residual add


# --------------------------------------------------------------------------------------
# Host wrapper
# --------------------------------------------------------------------------------------

def _affine_from_sums(s, ss, n, gamma, beta):
    """Fold BN batch stats + affine into one scale/shift pair: y = h*scale + shift."""
    mean = s / n
    var = jnp.maximum(ss / n - mean * mean, 0.0)
    scale = gamma * jax.lax.rsqrt(var + EPS)
    shift = beta - mean * scale
    return scale, shift


def _pick_tm(n, dp):
    """Row-tile size: as big as possible (better HBM roofline) with <=2 MiB f32 tiles."""
    cap = max(_SUBLANE, (2 << 20) // (dp * 4))       # rows per 2 MiB f32 tile
    tm = min(512, cap)
    tm = max(_SUBLANE, (tm // _SUBLANE) * _SUBLANE)
    if n < tm:
        tm = max(_SUBLANE, _round_up(n, _SUBLANE))
    return tm


def _vmem_limit_bytes(tm, dp):
    tile = tm * dp * 4                       # one f32 activation tile
    need = 4 * tile                          # double-buffered input + output tiles
    need += 4 * tile                         # f32 intermediates (h, h1, h2, r)
    need += 2 * dp * dp * 2                  # resident bf16 w1 + w2
    need += 16 * dp * 4                      # resident (1, D) vectors
    need += 8 << 20                          # headroom for spills / pipeline state
    return int(min(max(need, 32 << 20), 48 << 20))


@jax.jit
def residual_block(x, params):
    """x: (N, D) or (B, T, D) float32. params: see init_params()."""
    orig_shape = x.shape
    in_dtype = x.dtype
    if x.ndim == 3:
        x = x.reshape(-1, x.shape[-1])
    n, d = x.shape

    f32 = jnp.float32
    dp = _round_up(d, _LANE)                                 # lane-dense feature dim
    tm = _pick_tm(n, dp)
    n_pad = _round_up(n, tm)
    n_tiles = n_pad // tm

    # Pad activations (zeros) and parameters (zeros -> padded lanes stay exactly zero).
    x_p = jnp.zeros((n_pad, dp), f32).at[:n, :d].set(x.astype(f32))

    def pad_vec(v):
        return jnp.zeros((1, dp), f32).at[:, :d].set(v.reshape(1, d).astype(f32))

    def pad_mat(w):
        return jnp.zeros((dp, dp), jnp.bfloat16).at[:d, :d].set(w.astype(jnp.bfloat16))

    w1, b1 = pad_mat(params["w1_t"]), pad_vec(params["b1"])
    g1, be1 = pad_vec(params["gamma1"]), pad_vec(params["beta1"])
    w2, b2 = pad_mat(params["w2_t"]), pad_vec(params["b2"])
    g2, be2 = pad_vec(params["gamma2"]), pad_vec(params["beta2"])

    vlim = _vmem_limit_bytes(tm, dp)
    row_spec = pl.BlockSpec((tm, dp), lambda i: (i, 0))      # streamed / pipelined
    vec_spec = pl.BlockSpec((1, dp), lambda i: (0, 0))       # resident
    mat_spec = pl.BlockSpec((dp, dp), lambda i: (0, 0))      # resident
    vec_out = jax.ShapeDtypeStruct((1, dp), f32)

    # ---- pass 1: BN1 batch statistics ------------------------------------------------
    s1, ss1 = pl.pallas_call(
        _bn1_stats_kernel,
        grid=(n_tiles,),
        in_specs=[row_spec],
        out_specs=(vec_spec, vec_spec),
        out_shape=(vec_out, vec_out),
        compiler_params=pltpu.CompilerParams(
            dimension_semantics=("arbitrary",), vmem_limit_bytes=vlim),
    )(x_p)
    scale1, shift1 = _affine_from_sums(s1, ss1, n, g1, be1)

    # ---- pass 2: fc1(relu(bn1(x))) stats for BN2 --------------------------------------
    s2, ss2 = pl.pallas_call(
        functools.partial(_fc1_stats_kernel, n_valid=n, n_padded=n_pad),
        grid=(n_tiles,),
        in_specs=[row_spec, vec_spec, vec_spec, mat_spec, vec_spec],
        out_specs=(vec_spec, vec_spec),
        out_shape=(vec_out, vec_out),
        compiler_params=pltpu.CompilerParams(
            dimension_semantics=("arbitrary",), vmem_limit_bytes=vlim),
    )(x_p, scale1, shift1, w1, b1)
    scale2, shift2 = _affine_from_sums(s2, ss2, n, g2, be2)

    # ---- pass 3: apply the whole block per tile (fully parallel over rows) -------------
    out_p = pl.pallas_call(
        _apply_kernel,
        grid=(n_tiles,),
        in_specs=[row_spec, vec_spec, vec_spec, mat_spec, vec_spec,
                  vec_spec, vec_spec, mat_spec, vec_spec],
        out_specs=row_spec,
        out_shape=jax.ShapeDtypeStruct((n_pad, dp), f32),
        input_output_aliases={0: 0},          # write the result over x_pad in place
        compiler_params=pltpu.CompilerParams(
            dimension_semantics=("parallel",), vmem_limit_bytes=vlim),
    )(x_p, scale1, shift1, w1, b1, scale2, shift2, w2, b2)

    out = out_p[:n, :d].astype(in_dtype)
    if len(orig_shape) == 3:
        out = out.reshape(orig_shape)
    return out


# --------------------------------------------------------------------------------------
# Params / reference / test
# --------------------------------------------------------------------------------------

def init_params(key, dim):
    """Deterministic synthetic init matching the PyTorch module's __init__."""
    k1, k2, k3, k4 = jax.random.split(key, 4)
    bound = 1.0 / jnp.sqrt(dim)  # nn.Linear default init
    w1 = jax.random.uniform(k1, (dim, dim), jnp.float32, -bound, bound)   # fc1.weight
    b1 = jax.random.uniform(k2, (1, dim), jnp.float32, -bound, bound)     # fc1.bias
    w2 = jax.random.uniform(k3, (dim, dim), jnp.float32, -0.001, 0.001)   # fc2.weight
    b2 = jax.random.uniform(k4, (1, dim), jnp.float32, -0.001, 0.001)     # fc2.bias
    return {
        "w1_t": w1.T,                     # pre-transposed so kernels do x @ W.T
        "b1": b1,
        "gamma1": jnp.ones((1, dim), jnp.float32),
        "beta1": jnp.zeros((1, dim), jnp.float32),
        "w2_t": w2.T,
        "b2": b2,
        "gamma2": jnp.ones((1, dim), jnp.float32),
        "beta2": jnp.zeros((1, dim), jnp.float32),
    }


def residual_block_ref(x, p):
    """Pure-JAX f32 reference mirroring the PyTorch forward (training-mode BN, p=0 dropout)."""
    shp = x.shape
    if x.ndim == 3:
        x = x.reshape(-1, x.shape[-1])

    def bn(h, g, b):
        m = h.mean(0, keepdims=True)
        v = ((h - m) ** 2).mean(0, keepdims=True)
        return (h - m) / jnp.sqrt(v + EPS) * g + b

    h = jax.nn.relu(bn(x, p["gamma1"], p["beta1"]))
    h = h @ p["w1_t"] + p["b1"]
    h = jax.nn.relu(bn(h, p["gamma2"], p["beta2"]))
    r = h @ p["w2_t"] + p["b2"]
    out = x + r
    if len(shp) == 3:
        out = out.reshape(shp)
    return out


if __name__ == "__main__":
    key = jax.random.PRNGKey(0)
    kx, kp = jax.random.split(key)

    B, T, DIM = 2, 8, 32
    x = jax.random.normal(kx, (B, T, DIM), jnp.float32)
    params = init_params(kp, DIM)

    out = residual_block(x, params)
    out = jax.block_until_ready(out)

    ref = residual_block_ref(x, params)
    assert out.shape == x.shape
    max_err = float(jnp.max(jnp.abs(out - ref)))
    # bf16 MXU operands with f32 accumulation -> loosened tolerance vs f32 reference.
    assert jnp.allclose(out, ref, atol=5e-3, rtol=5e-3), f"mismatch vs reference (max err {max_err})"

    print("KERNEL_OK")
</pallas_src>

<mosaic_0001>
module attributes {stable_mosaic.version = 11 : i64} {
  func.func @_bn1_stats_kernel(%arg0: i32, %arg1: memref<16x128xf32, #tpu.memory_space<vmem>>, %arg2: memref<1x128xf32, #tpu.memory_space<vmem>>, %arg3: memref<1x128xf32, #tpu.memory_space<vmem>>) attributes {dimension_semantics = [#tpu.dimension_semantics<arbitrary>], iteration_bounds = array<i64: 1>, scalar_prefetch = 0 : i64, scratch_operands = 0 : i64, tpu.core_type = #tpu.core_type<tc>, window_params = [{transform_indices = @transform_0, window_bounds = array<i64: 16, 128>}, {pipeline_mode = #tpu.pipeline_mode<synchronous>, transform_indices = @transform_1, window_bounds = array<i64: 1, 128>}, {pipeline_mode = #tpu.pipeline_mode<synchronous>, transform_indices = @transform_2, window_bounds = array<i64: 1, 128>}]} {
    %c0_i32 = arith.constant 0 : i32
    %0 = arith.cmpi eq, %arg0, %c0_i32 : i32
    %1 = arith.extui %0 : i1 to i32
    %c0_i32_0 = arith.constant 0 : i32
    %2 = arith.cmpi ne, %1, %c0_i32_0 : i32
    scf.if %2 {
      %cst_11 = arith.constant 0.000000e+00 : f32
      %15 = vector.broadcast %cst_11 : f32 to vector<1x128xf32>
      %c0_12 = arith.constant 0 : index
      %c0_13 = arith.constant 0 : index
      %16 = vector.load %arg2[%c0_12, %c0_13] : memref<1x128xf32, #tpu.memory_space<vmem>>, vector<1x128xf32>
      tpu.vector_store %arg2[%c0_12, %c0_13], %15 {strides = array<i32>} : memref<1x128xf32, #tpu.memory_space<vmem>>, vector<1x128xf32>,
      %cst_14 = arith.constant 0.000000e+00 : f32
      %17 = vector.broadcast %cst_14 : f32 to vector<1x128xf32>
      %c0_15 = arith.constant 0 : index
      %c0_16 = arith.constant 0 : index
      %18 = vector.load %arg3[%c0_15, %c0_16] : memref<1x128xf32, #tpu.memory_space<vmem>>, vector<1x128xf32>
      tpu.vector_store %arg3[%c0_15, %c0_16], %17 {strides = array<i32>} : memref<1x128xf32, #tpu.memory_space<vmem>>, vector<1x128xf32>,
    } else {
    }
    %c0 = arith.constant 0 : index
    %c0_1 = arith.constant 0 : index
    %3 = vector.load %arg1[%c0, %c0_1] : memref<16x128xf32, #tpu.memory_space<vmem>>, vector<16x128xf32>
    %c0_2 = arith.constant 0 : index
    %c0_3 = arith.constant 0 : index
    %4 = vector.load %arg2[%c0_2, %c0_3] : memref<1x128xf32, #tpu.memory_space<vmem>>, vector<1x128xf32>
    %cst = arith.constant dense<0.000000e+00> : vector<128xf32>
    %5 = vector.multi_reduction <add>, %3, %cst [0] : vector<16x128xf32> to vector<128xf32>
    %6 = vector.shape_cast %5 : vector<128xf32> to vector<1x128xf32>
    %7 = arith.addf %4, %6 : vector<1x128xf32>
    %c0_4 = arith.constant 0 : index
    %c0_5 = arith.constant 0 : index
    %8 = vector.load %arg2[%c0_4, %c0_5] : memref<1x128xf32, #tpu.memory_space<vmem>>, vector<1x128xf32>
    tpu.vector_store %arg2[%c0_4, %c0_5], %7 {strides = array<i32>} : memref<1x128xf32, #tpu.memory_space<vmem>>, vector<1x128xf32>,
    %c0_6 = arith.constant 0 : index
    %c0_7 = arith.constant 0 : index
    %9 = vector.load %arg3[%c0_6, %c0_7] : memref<1x128xf32, #tpu.memory_space<vmem>>, vector<1x128xf32>
    %10 = arith.mulf %3, %3 : vector<16x128xf32>
    %cst_8 = arith.constant dense<0.000000e+00> : vector<128xf32>
    %11 = vector.multi_reduction <add>, %10, %cst_8 [0] : vector<16x128xf32> to vector<128xf32>
    %12 = vector.shape_cast %11 : vector<128xf32> to vector<1x128xf32>
    %13 = arith.addf %9, %12 : vector<1x128xf32>
    %c0_9 = arith.constant 0 : index
    %c0_10 = arith.constant 0 : index
    %14 = vector.load %arg3[%c0_9, %c0_10] : memref<1x128xf32, #tpu.memory_space<vmem>>, vector<1x128xf32>
    tpu.vector_store %arg3[%c0_9, %c0_10], %13 {strides = array<i32>} : memref<1x128xf32, #tpu.memory_space<vmem>>, vector<1x128xf32>,
    return
  }
  func.func @transform_0(%arg0: i32) -> (i32, i32) {
    %c0_i32 = arith.constant 0 : i32
    %c0_i32_0 = arith.constant 0 : i32
    return %arg0, %c0_i32 : i32, i32
  }
  func.func @transform_1(%arg0: i32) -> (i32, i32) {
    %c0_i32 = arith.constant 0 : i32
    %c0_i32_0 = arith.constant 0 : i32
    %c0_i32_1 = arith.constant 0 : i32
    return %c0_i32, %c0_i32_0 : i32, i32
  }
  func.func @transform_2(%arg0: i32) -> (i32, i32) {
    %c0_i32 = arith.constant 0 : i32
    %c0_i32_0 = arith.constant 0 : i32
    %c0_i32_1 = arith.constant 0 : i32
    return %c0_i32, %c0_i32_0 : i32, i32
  }
}

module attributes {stable_mosaic.version = 11 : i64} {
  func.func @_fc1_stats_kernel(%arg0: i32, %arg1: memref<16x128xf32, #tpu.memory_space<vmem>>, %arg2: memref<1x128xf32, #tpu.memory_space<vmem>>, %arg3: memref<1x128xf32, #tpu.memory_space<vmem>>, %arg4: memref<128x128xbf16, #tpu.memory_space<vmem>>, %arg5: memref<1x128xf32, #tpu.memory_space<vmem>>, %arg6: memref<1x128xf32, #tpu.memory_space<vmem>>, %arg7: memref<1x128xf32, #tpu.memory_space<vmem>>) attributes {dimension_semantics = [#tpu.dimension_semantics<arbitrary>], iteration_bounds = array<i64: 1>, scalar_prefetch = 0 : i64, scratch_operands = 0 : i64, tpu.core_type = #tpu.core_type<tc>, window_params = [{transform_indices = @transform_0, window_bounds = array<i64: 16, 128>}, {pipeline_mode = #tpu.pipeline_mode<synchronous>, transform_indices = @transform_1, window_bounds = array<i64: 1, 128>}, {pipeline_mode = #tpu.pipeline_mode<synchronous>, transform_indices = @transform_2, window_bounds = array<i64: 1, 128>}, {pipeline_mode = #tpu.pipeline_mode<synchronous>, transform_indices = @transform_3, window_bounds = array<i64: 128, 128>}, {pipeline_mode = #tpu.pipeline_mode<synchronous>, transform_indices = @transform_4, window_bounds = array<i64: 1, 128>}, {pipeline_mode = #tpu.pipeline_mode<synchronous>, transform_indices = @transform_5, window_bounds = array<i64: 1, 128>}, {pipeline_mode = #tpu.pipeline_mode<synchronous>, transform_indices = @transform_6, window_bounds = array<i64: 1, 128>}]} {
    %c0_i32 = arith.constant 0 : i32
    %0 = arith.cmpi eq, %arg0, %c0_i32 : i32
    %1 = arith.extui %0 : i1 to i32
    %c0_i32_0 = arith.constant 0 : i32
    %2 = arith.cmpi ne, %1, %c0_i32_0 : i32
    scf.if %2 {
      %cst_21 = arith.constant 0.000000e+00 : f32
      %29 = vector.broadcast %cst_21 : f32 to vector<1x128xf32>
      %c0_22 = arith.constant 0 : index
      %c0_23 = arith.constant 0 : index
      %30 = vector.load %arg6[%c0_22, %c0_23] : memref<1x128xf32, #tpu.memory_space<vmem>>, vector<1x128xf32>
      tpu.vector_store %arg6[%c0_22, %c0_23], %29 {strides = array<i32>} : memref<1x128xf32, #tpu.memory_space<vmem>>, vector<1x128xf32>,
      %cst_24 = arith.constant 0.000000e+00 : f32
      %31 = vector.broadcast %cst_24 : f32 to vector<1x128xf32>
      %c0_25 = arith.constant 0 : index
      %c0_26 = arith.constant 0 : index
      %32 = vector.load %arg7[%c0_25, %c0_26] : memref<1x128xf32, #tpu.memory_space<vmem>>, vector<1x128xf32>
      tpu.vector_store %arg7[%c0_25, %c0_26], %31 {strides = array<i32>} : memref<1x128xf32, #tpu.memory_space<vmem>>, vector<1x128xf32>,
    } else {
    }
    %c0 = arith.constant 0 : index
    %c0_1 = arith.constant 0 : index
    %3 = vector.load %arg1[%c0, %c0_1] : memref<16x128xf32, #tpu.memory_space<vmem>>, vector<16x128xf32>
    %c0_2 = arith.constant 0 : index
    %c0_3 = arith.constant 0 : index
    %4 = vector.load %arg2[%c0_2, %c0_3] : memref<1x128xf32, #tpu.memory_space<vmem>>, vector<1x128xf32>
    %5 = vector.broadcast %4 : vector<1x128xf32> to vector<16x128xf32>
    %6 = arith.mulf %3, %5 : vector<16x128xf32>
    %c0_4 = arith.constant 0 : index
    %c0_5 = arith.constant 0 : index
    %7 = vector.load %arg3[%c0_4, %c0_5] : memref<1x128xf32, #tpu.memory_space<vmem>>, vector<1x128xf32>
    %8 = vector.broadcast %7 : vector<1x128xf32> to vector<16x128xf32>
    %9 = arith.addf %6, %8 : vector<16x128xf32>
    %cst = arith.constant 0.000000e+00 : f32
    %10 = vector.broadcast %cst : f32 to vector<16x128xf32>
    %11 = arith.maximumf %9, %10 : vector<16x128xf32>
    %12 = arith.truncf %11 : vector<16x128xf32> to vector<16x128xbf16>
    %c0_6 = arith.constant 0 : index
    %c0_7 = arith.constant 0 : index
    %13 = vector.load %arg4[%c0_6, %c0_7] : memref<128x128xbf16, #tpu.memory_space<vmem>>, vector<128x128xbf16>
    %cst_8 = arith.constant dense<0.000000e+00> : vector<16x128xf32>
    %14 = tpu.matmul %12, %13, %cst_8 {dimension_numbers = #tpu.dot_dimension_numbers<[1], [0], [0], [1], [0, 0, 1, 1], [], []>} : vector<16x128xbf16>, vector<128x128xbf16>, vector<16x128xf32> -> vector<16x128xf32>
    %c0_9 = arith.constant 0 : index
    %c0_10 = arith.constant 0 : index
    %15 = vector.load %arg5[%c0_9, %c0_10] : memref<1x128xf32, #tpu.memory_space<vmem>>, vector<1x128xf32>
    %16 = vector.broadcast %15 : vector<1x128xf32> to vector<16x128xf32>
    %17 = arith.addf %14, %16 : vector<16x128xf32>
    %c0_11 = arith.constant 0 : index
    %c0_12 = arith.constant 0 : index
    %18 = vector.load %arg6[%c0_11, %c0_12] : memref<1x128xf32, #tpu.memory_space<vmem>>, vector<1x128xf32>
    %cst_13 = arith.constant dense<0.000000e+00> : vector<128xf32>
    %19 = vector.multi_reduction <add>, %17, %cst_13 [0] : vector<16x128xf32> to vector<128xf32>
    %20 = vector.shape_cast %19 : vector<128xf32> to vector<1x128xf32>
    %21 = arith.addf %18, %20 : vector<1x128xf32>
    %c0_14 = arith.constant 0 : index
    %c0_15 = arith.constant 0 : index
    %22 = vector.load %arg6[%c0_14, %c0_15] : memref<1x128xf32, #tpu.memory_space<vmem>>, vector<1x128xf32>
    tpu.vector_store %arg6[%c0_14, %c0_15], %21 {strides = array<i32>} : memref<1x128xf32, #tpu.memory_space<vmem>>, vector<1x128xf32>,
    %c0_16 = arith.constant 0 : index
    %c0_17 = arith.constant 0 : index
    %23 = vector.load %arg7[%c0_16, %c0_17] : memref<1x128xf32, #tpu.memory_space<vmem>>, vector<1x128xf32>
    %24 = arith.mulf %17, %17 : vector<16x128xf32>
    %cst_18 = arith.constant dense<0.000000e+00> : vector<128xf32>
    %25 = vector.multi_reduction <add>, %24, %cst_18 [0] : vector<16x128xf32> to vector<128xf32>
    %26 = vector.shape_cast %25 : vector<128xf32> to vector<1x128xf32>
    %27 = arith.addf %23, %26 : vector<1x128xf32>
    %c0_19 = arith.constant 0 : index
    %c0_20 = arith.constant 0 : index
    %28 = vector.load %arg7[%c0_19, %c0_20] : memref<1x128xf32, #tpu.memory_space<vmem>>, vector<1x128xf32>
    tpu.vector_store %arg7[%c0_19, %c0_20], %27 {strides = array<i32>} : memref<1x128xf32, #tpu.memory_space<vmem>>, vector<1x128xf32>,
    return
  }
  func.func @transform_0(%arg0: i32) -> (i32, i32) {
    %c0_i32 = arith.constant 0 : i32
    %c0_i32_0 = arith.constant 0 : i32
    return %arg0, %c0_i32 : i32, i32
  }
  func.func @transform_1(%arg0: i32) -> (i32, i32) {
    %c0_i32 = arith.constant 0 : i32
    %c0_i32_0 = arith.constant 0 : i32
    %c0_i32_1 = arith.constant 0 : i32
    return %c0_i32, %c0_i32_0 : i32, i32
  }
  func.func @transform_2(%arg0: i32) -> (i32, i32) {
    %c0_i32 = arith.constant 0 : i32
    %c0_i32_0 = arith.constant 0 : i32
    %c0_i32_1 = arith.constant 0 : i32
    return %c0_i32, %c0_i32_0 : i32, i32
  }
  func.func @transform_3(%arg0: i32) -> (i32, i32) {
    %c0_i32 = arith.constant 0 : i32
    %c0_i32_0 = arith.constant 0 : i32
    %c0_i32_1 = arith.constant 0 : i32
    return %c0_i32, %c0_i32_0 : i32, i32
  }
  func.func @transform_4(%arg0: i32) -> (i32, i32) {
    %c0_i32 = arith.constant 0 : i32
    %c0_i32_0 = arith.constant 0 : i32
    %c0_i32_1 = arith.constant 0 : i32
    return %c0_i32, %c0_i32_0 : i32, i32
  }
  func.func @transform_5(%arg0: i32) -> (i32, i32) {
    %c0_i32 = arith.constant 0 : i32
    %c0_i32_0 = arith.constant 0 : i32
    %c0_i32_1 = arith.constant 0 : i32
    return %c0_i32, %c0_i32_0 : i32, i32
  }
  func.func @transform_6(%arg0: i32) -> (i32, i32) {
    %c0_i32 = arith.constant 0 : i32
    %c0_i32_0 = arith.constant 0 : i32
    %c0_i32_1 = arith.constant 0 : i32
    return %c0_i32, %c0_i32_0 : i32, i32
  }
}

module attributes {stable_mosaic.version = 11 : i64} {
  func.func @_apply_kernel(%arg0: i32, %arg1: memref<16x128xf32, #tpu.memory_space<vmem>>, %arg2: memref<1x128xf32, #tpu.memory_space<vmem>>, %arg3: memref<1x128xf32, #tpu.memory_space<vmem>>, %arg4: memref<128x128xbf16, #tpu.memory_space<vmem>>, %arg5: memref<1x128xf32, #tpu.memory_space<vmem>>, %arg6: memref<1x128xf32, #tpu.memory_space<vmem>>, %arg7: memref<1x128xf32, #tpu.memory_space<vmem>>, %arg8: memref<128x128xbf16, #tpu.memory_space<vmem>>, %arg9: memref<1x128xf32, #tpu.memory_space<vmem>>, %arg10: memref<16x128xf32, #tpu.memory_space<vmem>>) attributes {dimension_semantics = [#tpu.dimension_semantics<parallel>], iteration_bounds = array<i64: 1>, scalar_prefetch = 0 : i64, scratch_operands = 0 : i64, tpu.core_type = #tpu.core_type<tc>, window_params = [{transform_indices = @transform_0, window_bounds = array<i64: 16, 128>}, {pipeline_mode = #tpu.pipeline_mode<synchronous>, transform_indices = @transform_1, window_bounds = array<i64: 1, 128>}, {pipeline_mode = #tpu.pipeline_mode<synchronous>, transform_indices = @transform_2, window_bounds = array<i64: 1, 128>}, {pipeline_mode = #tpu.pipeline_mode<synchronous>, transform_indices = @transform_3, window_bounds = array<i64: 128, 128>}, {pipeline_mode = #tpu.pipeline_mode<synchronous>, transform_indices = @transform_4, window_bounds = array<i64: 1, 128>}, {pipeline_mode = #tpu.pipeline_mode<synchronous>, transform_indices = @transform_5, window_bounds = array<i64: 1, 128>}, {pipeline_mode = #tpu.pipeline_mode<synchronous>, transform_indices = @transform_6, window_bounds = array<i64: 1, 128>}, {pipeline_mode = #tpu.pipeline_mode<synchronous>, transform_indices = @transform_7, window_bounds = array<i64: 128, 128>}, {pipeline_mode = #tpu.pipeline_mode<synchronous>, transform_indices = @transform_8, window_bounds = array<i64: 1, 128>}, {transform_indices = @transform_9, window_bounds = array<i64: 16, 128>}]} {
    %c0 = arith.constant 0 : index
    %c0_0 = arith.constant 0 : index
    %0 = vector.load %arg1[%c0, %c0_0] : memref<16x128xf32, #tpu.memory_space<vmem>>, vector<16x128xf32>
    %c0_1 = arith.constant 0 : index
    %c0_2 = arith.constant 0 : index
    %1 = vector.load %arg2[%c0_1, %c0_2] : memref<1x128xf32, #tpu.memory_space<vmem>>, vector<1x128xf32>
    %2 = vector.broadcast %1 : vector<1x128xf32> to vector<16x128xf32>
    %3 = arith.mulf %0, %2 : vector<16x128xf32>
    %c0_3 = arith.constant 0 : index
    %c0_4 = arith.constant 0 : index
    %4 = vector.load %arg3[%c0_3, %c0_4] : memref<1x128xf32, #tpu.memory_space<vmem>>, vector<1x128xf32>
    %5 = vector.broadcast %4 : vector<1x128xf32> to vector<16x128xf32>
    %6 = arith.addf %3, %5 : vector<16x128xf32>
    %cst = arith.constant 0.000000e+00 : f32
    %7 = vector.broadcast %cst : f32 to vector<16x128xf32>
    %8 = arith.maximumf %6, %7 : vector<16x128xf32>
    %9 = arith.truncf %8 : vector<16x128xf32> to vector<16x128xbf16>
    %c0_5 = arith.constant 0 : index
    %c0_6 = arith.constant 0 : index
    %10 = vector.load %arg4[%c0_5, %c0_6] : memref<128x128xbf16, #tpu.memory_space<vmem>>, vector<128x128xbf16>
    %cst_7 = arith.constant dense<0.000000e+00> : vector<16x128xf32>
    %11 = tpu.matmul %9, %10, %cst_7 {dimension_numbers = #tpu.dot_dimension_numbers<[1], [0], [0], [1], [0, 0, 1, 1], [], []>} : vector<16x128xbf16>, vector<128x128xbf16>, vector<16x128xf32> -> vector<16x128xf32>
    %c0_8 = arith.constant 0 : index
    %c0_9 = arith.constant 0 : index
    %12 = vector.load %arg5[%c0_8, %c0_9] : memref<1x128xf32, #tpu.memory_space<vmem>>, vector<1x128xf32>
    %13 = vector.broadcast %12 : vector<1x128xf32> to vector<16x128xf32>
    %14 = arith.addf %11, %13 : vector<16x128xf32>
    %c0_10 = arith.constant 0 : index
    %c0_11 = arith.constant 0 : index
    %15 = vector.load %arg6[%c0_10, %c0_11] : memref<1x128xf32, #tpu.memory_space<vmem>>, vector<1x128xf32>
    %16 = vector.broadcast %15 : vector<1x128xf32> to vector<16x128xf32>
    %17 = arith.mulf %14, %16 : vector<16x128xf32>
    %c0_12 = arith.constant 0 : index
    %c0_13 = arith.constant 0 : index
    %18 = vector.load %arg7[%c0_12, %c0_13] : memref<1x128xf32, #tpu.memory_space<vmem>>, vector<1x128xf32>
    %19 = vector.broadcast %18 : vector<1x128xf32> to vector<16x128xf32>
    %20 = arith.addf %17, %19 : vector<16x128xf32>
    %cst_14 = arith.constant 0.000000e+00 : f32
    %21 = vector.broadcast %cst_14 : f32 to vector<16x128xf32>
    %22 = arith.maximumf %20, %21 : vector<16x128xf32>
    %23 = arith.truncf %22 : vector<16x128xf32> to vector<16x128xbf16>
    %c0_15 = arith.constant 0 : index
    %c0_16 = arith.constant 0 : index
    %24 = vector.load %arg8[%c0_15, %c0_16] : memref<128x128xbf16, #tpu.memory_space<vmem>>, vector<128x128xbf16>
    %cst_17 = arith.constant dense<0.000000e+00> : vector<16x128xf32>
    %25 = tpu.matmul %23, %24, %cst_17 {dimension_numbers = #tpu.dot_dimension_numbers<[1], [0], [0], [1], [0, 0, 1, 1], [], []>} : vector<16x128xbf16>, vector<128x128xbf16>, vector<16x128xf32> -> vector<16x128xf32>
    %c0_18 = arith.constant 0 : index
    %c0_19 = arith.constant 0 : index
    %26 = vector.load %arg9[%c0_18, %c0_19] : memref<1x128xf32, #tpu.memory_space<vmem>>, vector<1x128xf32>
    %27 = vector.broadcast %26 : vector<1x128xf32> to vector<16x128xf32>
    %28 = arith.addf %25, %27 : vector<16x128xf32>
    %29 = arith.addf %0, %28 : vector<16x128xf32>
    %c0_20 = arith.constant 0 : index
    %c0_21 = arith.constant 0 : index
    %30 = vector.load %arg10[%c0_20, %c0_21] : memref<16x128xf32, #tpu.memory_space<vmem>>, vector<16x128xf32>
    tpu.vector_store %arg10[%c0_20, %c0_21], %29 {strides = array<i32>} : memref<16x128xf32, #tpu.memory_space<vmem>>, vector<16x128xf32>,
    return
  }
  func.func @transform_0(%arg0: i32) -> (i32, i32) {
    %c0_i32 = arith.constant 0 : i32
    %c0_i32_0 = arith.constant 0 : i32
    return %arg0, %c0_i32 : i32, i32
  }
  func.func @transform_1(%arg0: i32) -> (i32, i32) {
    %c0_i32 = arith.constant 0 : i32
    %c0_i32_0 = arith.constant 0 : i32
    %c0_i32_1 = arith.constant 0 : i32
    return %c0_i32, %c0_i32_0 : i32, i32
  }
  func.func @transform_2(%arg0: i32) -> (i32, i32) {
    %c0_i32 = arith.constant 0 : i32
    %c0_i32_0 = arith.constant 0 : i32
    %c0_i32_1 = arith.constant 0 : i32
    return %c0_i32, %c0_i32_0 : i32, i32
  }
  func.func @transform_3(%arg0: i32) -> (i32, i32) {
    %c0_i32 = arith.constant 0 : i32
    %c0_i32_0 = arith.constant 0 : i32
    %c0_i32_1 = arith.constant 0 : i32
    return %c0_i32, %c0_i32_0 : i32, i32
  }
  func.func @transform_4(%arg0: i32) -> (i32, i32) {
    %c0_i32 = arith.constant 0 : i32
    %c0_i32_0 = arith.constant 0 : i32
    %c0_i32_1 = arith.constant 0 : i32
    return %c0_i32, %c0_i32_0 : i32, i32
  }
  func.func @transform_5(%arg0: i32) -> (i32, i32) {
    %c0_i32 = arith.constant 0 : i32
    %c0_i32_0 = arith.constant 0 : i32
    %c0_i32_1 = arith.constant 0 : i32
    return %c0_i32, %c0_i32_0 : i32, i32
  }
  func.func @transform_6(%arg0: i32) -> (i32, i32) {
    %c0_i32 = arith.constant 0 : i32
    %c0_i32_0 = arith.constant 0 : i32
    %c0_i32_1 = arith.constant 0 : i32
    return %c0_i32, %c0_i32_0 : i32, i32
  }
  func.func @transform_7(%arg0: i32) -> (i32, i32) {
    %c0_i32 = arith.constant 0 : i32
    %c0_i32_0 = arith.constant 0 : i32
    %c0_i32_1 = arith.constant 0 : i32
    return %c0_i32, %c0_i32_0 : i32, i32
  }
  func.func @transform_8(%arg0: i32) -> (i32, i32) {
    %c0_i32 = arith.constant 0 : i32
    %c0_i32_0 = arith.constant 0 : i32
    %c0_i32_1 = arith.constant 0 : i32
    return %c0_i32, %c0_i32_0 : i32, i32
  }
  func.func @transform_9(%arg0: i32) -> (i32, i32) {
    %c0_i32 = arith.constant 0 : i32
    %c0_i32_0 = arith.constant 0 : i32
    return %arg0, %c0_i32 : i32, i32
  }
}

</mosaic_0001>

<llo_original>
// kernel: residual_block.3
$region0: #{residual_block.3}
  #allocation0 [shape = 'u32[]', space=smem, size = 0x4, offset = 0x4, fixed_abs, tag = 'smem constant byte address 0x4 - core index']
  #allocation1 [shape = 'u32[72,128]{1,0:T(1,128)}', space=vmem, size = 0x9000, scoped, tag = 'internal scratch']
  %s0 = inlined_call_operand.vmem [shape: f32[16,128], index: 0, kind: input, shape index: {}]
  %s1 = inlined_call_operand.vmem [shape: f32[1,128], index: 1, kind: output, shape index: {0}]
  %s2 = inlined_call_operand.vmem [shape: f32[1,128], index: 2, kind: output, shape index: {1}]
  %3 = xla_tuple %s1, %s2
  %s4 = sld [smem:[#allocation0]]
  $region26: #{residual_block.3} parent=0
    _
  %s6 = ssub.s32 1, %s4
  %s7 = scalar_select 0, %s6, %s4
  // Predicated region
  $region2: #{residual_block.3} parent=0 // pred_check
    _
  $region3: #{residual_block.3} parent=0 // pred_check_branch
    %9 = sbr.rel (0) target = $region5
  $region4: #{residual_block.3} parent=0 // pred_region
    _
  $region5: #{residual_block.3} parent=0 // pred_fallthru
    _
  %p10 = scmp.eq.s32.totalorder 0, 0
  // Predicated region
  $region6: #{residual_block.3} parent=0 // pred_check
    %p11 = pneg %p10
  $region7: #{residual_block.3} parent=0 // pred_check_branch
    %13 = sbr.rel (%p11) target = $region9
  $region8: #{residual_block.3} parent=0 // pred_region
    %14 = vst [vmem:[%s1] sm:$0x1] 0.0
    %15 = vst [vmem:[%s2] sm:$0x1] 0.0
  $region9: #{residual_block.3} parent=0 // pred_fallthru
    _
  %v16 = vld [vmem:[%s0] sm:$0xff]
  %v17 = vld [vmem:[%s0 + $0x8] sm:$0xff]
  %v18 = vld [vmem:[%s1] sm:$0x1]
  %v19 = vadd.f32 %v16, %v17
  %v20 = vrot.slane %v19, 4
  %v21 = vadd.f32 %v19, %v20
  %v22 = vrot.slane %v21, 2
  %v23 = vadd.f32 %v21, %v22
  %v24 = vrot.slane %v23, 1
  %v25 = vadd.f32 %v23, %v24
  %v26 = vadd.f32 %v18, %v25
  %27 = vst [vmem:[%s1] sm:$0x1] %v26
  %v28 = vld [vmem:[%s2] sm:$0x1]
  %v29 = vmul.f32 %v16, %v16
  %v30 = vmul.f32 %v17, %v17
  %v31 = vadd.f32 %v29, %v30
  %v32 = vrot.slane %v31, 4
  %v33 = vadd.f32 %v31, %v32
  %v34 = vrot.slane %v33, 2
  %v35 = vadd.f32 %v33, %v34
  %v36 = vrot.slane %v35, 1
  %v37 = vadd.f32 %v35, %v36
  %v38 = vadd.f32 %v28, %v37
  %39 = vst [vmem:[%s2] sm:$0x1] %v38
  // Predicated region
  $region10: #{residual_block.3} parent=0 // pred_check
    _
  $region11: #{residual_block.3} parent=0 // pred_check_branch
    %41 = sbr.rel (0) target = $region13
  $region12: #{residual_block.3} parent=0 // pred_region
    _
  $region13: #{residual_block.3} parent=0 // pred_fallthru
    _
  // Predicated region
  $region14: #{residual_block.3} parent=0 // pred_check
    _
  $region15: #{residual_block.3} parent=0 // pred_check_branch
    %43 = sbr.rel (0) target = $region17
  $region16: #{residual_block.3} parent=0 // pred_region
    _
  $region17: #{residual_block.3} parent=0 // pred_fallthru
    _
  // Predicated region
  $region18: #{residual_block.3} parent=0 // pred_check
    _
  $region19: #{residual_block.3} parent=0 // pred_check_branch
    %45 = sbr.rel (0) target = $region21
  $region20: #{residual_block.3} parent=0 // pred_region
    _
  $region21: #{residual_block.3} parent=0 // pred_fallthru
    _
  // Predicated region
  $region22: #{residual_block.3} parent=0 // pred_check
    _
  $region23: #{residual_block.3} parent=0 // pred_check_branch
    %47 = sbr.rel (0) target = $region25
  $region24: #{residual_block.3} parent=0 // pred_region
    _
  $region25: #{residual_block.3} parent=0 // pred_fallthru
    _

// kernel: residual_block.4
$region0: #{residual_block.4}
  #allocation0 [shape = 'u32[]', space=smem, size = 0x4, offset = 0x4, fixed_abs, tag = 'smem constant byte address 0x4 - core index']
  #allocation1 [shape = 'u32[72,128]{1,0:T(1,128)}', space=vmem, size = 0x9000, scoped, tag = 'internal scratch']
  %s0 = inlined_call_operand.vmem [shape: f32[16,128], index: 0, kind: input, shape index: {}]
  %s1 = inlined_call_operand.vmem [shape: f32[1,128], index: 1, kind: input, shape index: {}]
  %s2 = inlined_call_operand.vmem [shape: f32[1,128], index: 2, kind: input, shape index: {}]
  %s3 = inlined_call_operand.vmem [shape: bf16[128,128], index: 3, kind: input, shape index: {}]
  %s4 = inlined_call_operand.vmem [shape: f32[1,128], index: 4, kind: input, shape index: {}]
  %s5 = inlined_call_operand.vmem [shape: f32[1,128], index: 5, kind: output, shape index: {0}]
  %s6 = inlined_call_operand.vmem [shape: f32[1,128], index: 6, kind: output, shape index: {1}]
  %7 = xla_tuple %s5, %s6
  %s8 = sld [smem:[#allocation0]]
  $region42: #{residual_block.4} parent=0
    _
  %s10 = ssub.s32 1, %s8
  %s11 = scalar_select 0, %s10, %s8
  // Predicated region
  $region2: #{residual_block.4} parent=0 // pred_check
    _
  $region3: #{residual_block.4} parent=0 // pred_check_branch
    %13 = sbr.rel (0) target = $region5
  $region4: #{residual_block.4} parent=0 // pred_region
    _
  $region5: #{residual_block.4} parent=0 // pred_fallthru
    _
  // Predicated region
  $region6: #{residual_block.4} parent=0 // pred_check
    _
  $region7: #{residual_block.4} parent=0 // pred_check_branch
    %15 = sbr.rel (0) target = $region9
  $region8: #{residual_block.4} parent=0 // pred_region
    _
  $region9: #{residual_block.4} parent=0 // pred_fallthru
    _
  // Predicated region
  $region10: #{residual_block.4} parent=0 // pred_check
    _
  $region11: #{residual_block.4} parent=0 // pred_check_branch
    %17 = sbr.rel (0) target = $region13
  $region12: #{residual_block.4} parent=0 // pred_region
    _
  $region13: #{residual_block.4} parent=0 // pred_fallthru
    _
  // Predicated region
  $region14: #{residual_block.4} parent=0 // pred_check
    _
  $region15: #{residual_block.4} parent=0 // pred_check_branch
    %19 = sbr.rel (0) target = $region17
  $region16: #{residual_block.4} parent=0 // pred_region
    _
  $region17: #{residual_block.4} parent=0 // pred_fallthru
    _
  // Predicated region
  $region18: #{residual_block.4} parent=0 // pred_check
    _
  $region19: #{residual_block.4} parent=0 // pred_check_branch
    %21 = sbr.rel (0) target = $region21
  $region20: #{residual_block.4} parent=0 // pred_region
    _
  $region21: #{residual_block.4} parent=0 // pred_fallthru
    _
  %p22 = scmp.eq.s32.totalorder 0, 0
  // Predicated region
  $region22: #{residual_block.4} parent=0 // pred_check
    %p23 = pneg %p22
  $region23: #{residual_block.4} parent=0 // pred_check_branch
    %25 = sbr.rel (%p23) target = $region25
  $region24: #{residual_block.4} parent=0 // pred_region
    %26 = vst [vmem:[%s5] sm:$0x1] 0.0
    %27 = vst [vmem:[%s6] sm:$0x1] 0.0
  $region25: #{residual_block.4} parent=0 // pred_fallthru
    _
  %v28 = vld [vmem:[%s0] sm:$0xff]
  %v29 = vld [vmem:[%s0 + $0x8] sm:$0xff]
  %v30 = vld [vmem:[%s1] sm:$0x1]
  %v32 = vperm.slane %v30, 0
  %v34 = vmul.f32 %v28, %v32
  %v35 = vmul.f32 %v29, %v32
  %v36 = vld [vmem:[%s2] sm:$0x1]
  %v38 = vperm.slane %v36, 0
  %v40 = vadd.f32 %v34, %v38
  %v41 = vadd.f32 %v35, %v38
  %v42 = vmax.f32 %v40, 0.0
  %v43 = vmax.f32 %v41, 0.0
  %v44 = vpack.c.bf16 %v43, %v42
  %v45 = vld [vmem:[%s3] sm:$0xf]
  %v46 = vld [vmem:[%s3 + $0x4] sm:$0xf]
  %v47 = vld [vmem:[%s3 + $0x8] sm:$0xf]
  %v48 = vld [vmem:[%s3 + $0xc] sm:$0xf]
  %v49 = vld [vmem:[%s3 + $0x10] sm:$0xf]
  %v50 = vld [vmem:[%s3 + $0x14] sm:$0xf]
  %v51 = vld [vmem:[%s3 + $0x18] sm:$0xf]
  %v52 = vld [vmem:[%s3 + $0x1c] sm:$0xf]
  %v53 = vld [vmem:[%s3 + $0x20] sm:$0xf]
  %v54 = vld [vmem:[%s3 + $0x24] sm:$0xf]
  %v55 = vld [vmem:[%s3 + $0x28] sm:$0xf]
  %v56 = vld [vmem:[%s3 + $0x2c] sm:$0xf]
  %v57 = vld [vmem:[%s3 + $0x30] sm:$0xf]
  %v58 = vld [vmem:[%s3 + $0x34] sm:$0xf]
  %v59 = vld [vmem:[%s3 + $0x38] sm:$0xf]
  %v60 = vld [vmem:[%s3 + $0x3c] sm:$0xf]
  %v61 = vld [vmem:[%s4] sm:$0x1]
  %v63 = vperm.slane %v61, 0
  %v81 = vunpack.c.l.b16 %v45
  %v82 = vunpack.c.l.b16 %v46
  %v83 = vunpack.c.l.b16 %v47
  %v84 = vunpack.c.l.b16 %v48
  %v85 = vunpack.c.l.b16 %v49
  %v86 = vunpack.c.l.b16 %v50
  %v87 = vunpack.c.l.b16 %v51
  %v88 = vunpack.c.l.b16 %v52
  %v89 = vunpack.c.l.b16 %v53
  %v90 = vunpack.c.l.b16 %v54
  %v91 = vunpack.c.l.b16 %v55
  %v92 = vunpack.c.l.b16 %v56
  %v93 = vunpack.c.l.b16 %v57
  %v94 = vunpack.c.l.b16 %v58
  %v95 = vunpack.c.l.b16 %v59
  %v96 = vunpack.c.l.b16 %v60
  %v97 = vpack.c.b16 %v82, %v81
  %v98 = vpack.c.b16 %v84, %v83
  %v99 = vpack.c.b16 %v86, %v85
  %v100 = vpack.c.b16 %v88, %v87
  %v101 = vpack.c.b16 %v90, %v89
  %v102 = vpack.c.b16 %v92, %v91
  %v103 = vpack.c.b16 %v94, %v93
  %v104 = vpack.c.b16 %v96, %v95
  %113 = vmatpush.bf16.msra.mxu0 %v104
  %114 = vmatpush.bf16.msra.mxu0 %v103
  %115 = vmatpush.bf16.msra.mxu0 %v102
  %116 = vmatpush.bf16.msra.mxu0 %v101
  %117 = vmatpush.bf16.msra.mxu0 %v100
  %118 = vmatpush.bf16.msra.mxu0 %v99
  %119 = vmatpush.bf16.msra.mxu0 %v98
  %120 = vmatpush.bf16.msra.mxu0 %v97
  %121 = vmatmul.bf16.gmra.mxu0 %v44
  %v122 = vpop.f32.mrf.mxu0
  %v123 = vadd.f32 %v63, %v122
  %v124 = vpop.f32.mrf.mxu0
  %v125 = vadd.f32 %v63, %v124
  %126 = vdwg.mxu0
  %v127 = vld [vmem:[%s5] sm:$0x1]
  %v128 = vadd.f32 %v123, %v125
  %v129 = vrot.slane %v128, 4
  %v130 = vadd.f32 %v128, %v129
  %v131 = vrot.slane %v130, 2
  %v132 = vadd.f32 %v130, %v131
  %v133 = vrot.slane %v132, 1
  %v134 = vadd.f32 %v132, %v133
  %v135 = vadd.f32 %v127, %v134
  %136 = vst [vmem:[%s5] sm:$0x1] %v135
  %v137 = vld [vmem:[%s6] sm:$0x1]
  %v138 = vmul.f32 %v123, %v123
  %v139 = vmul.f32 %v125, %v125
  %v140 = vadd.f32 %v138, %v139
  %v141 = vrot.slane %v140, 4
  %v142 = vadd.f32 %v140, %v141
  %v143 = vrot.slane %v142, 2
  %v144 = vadd.f32 %v142, %v143
  %v145 = vrot.slane %v144, 1
  %v146 = vadd.f32 %v144, %v145
  %v147 = vadd.f32 %v137, %v146
  %148 = vst [vmem:[%s6] sm:$0x1] %v147
  // Predicated region
  $region26: #{residual_block.4} parent=0 // pred_check
    _
  $region27: #{residual_block.4} parent=0 // pred_check_branch
    %150 = sbr.rel (0) target = $region29
  $region28: #{residual_block.4} parent=0 // pred_region
    _
  $region29: #{residual_block.4} parent=0 // pred_fallthru
    _
  // Predicated region
  $region30: #{residual_block.4} parent=0 // pred_check
    _
  $region31: #{residual_block.4} parent=0 // pred_check_branch
    %152 = sbr.rel (0) target = $region33
  $region32: #{residual_block.4} parent=0 // pred_region
    _
  $region33: #{residual_block.4} parent=0 // pred_fallthru
    _
  // Predicated region
  $region34: #{residual_block.4} parent=0 // pred_check
    _
  $region35: #{residual_block.4} parent=0 // pred_check_branch
    %154 = sbr.rel (0) target = $region37
  $region36: #{residual_block.4} parent=0 // pred_region
    _
  $region37: #{residual_block.4} parent=0 // pred_fallthru
    _
  // Predicated region
  $region38: #{residual_block.4} parent=0 // pred_check
    _
  $region39: #{residual_block.4} parent=0 // pred_check_branch
    %156 = sbr.rel (0) target = $region41
  $region40: #{residual_block.4} parent=0 // pred_region
    _
  $region41: #{residual_block.4} parent=0 // pred_fallthru
    _

// kernel: residual_block.5
$region0: #{residual_block.5}
  #allocation0 [shape = 'u32[]', space=smem, size = 0x4, offset = 0x4, fixed_abs, tag = 'smem constant byte address 0x4 - core index']
  #allocation1 [shape = 'u32[72,128]{1,0:T(1,128)}', space=vmem, size = 0x9000, scoped, tag = 'internal scratch']
  %s0 = inlined_call_operand.vmem [shape: f32[16,128], index: 0, kind: input, shape index: {}, may-alias: {0,9}]
  %s1 = inlined_call_operand.vmem [shape: f32[1,128], index: 1, kind: input, shape index: {}]
  %s2 = inlined_call_operand.vmem [shape: f32[1,128], index: 2, kind: input, shape index: {}]
  %s3 = inlined_call_operand.vmem [shape: bf16[128,128], index: 3, kind: input, shape index: {}]
  %s4 = inlined_call_operand.vmem [shape: f32[1,128], index: 4, kind: input, shape index: {}]
  %s5 = inlined_call_operand.vmem [shape: f32[1,128], index: 5, kind: input, shape index: {}]
  %s6 = inlined_call_operand.vmem [shape: f32[1,128], index: 6, kind: input, shape index: {}]
  %s7 = inlined_call_operand.vmem [shape: bf16[128,128], index: 7, kind: input, shape index: {}]
  %s8 = inlined_call_operand.vmem [shape: f32[1,128], index: 8, kind: input, shape index: {}]
  %s9 = inlined_call_operand.vmem [shape: f32[16,128], index: 9, kind: output, shape index: {}, may-alias: {0,9}]
  %s10 = sld [smem:[#allocation0]]
  $region46: #{residual_block.5} parent=0
    _
  %s12 = ssub.s32 1, %s10
  %s13 = scalar_select 0, %s12, %s10
  // Predicated region
  $region2: #{residual_block.5} parent=0 // pred_check
    _
  $region3: #{residual_block.5} parent=0 // pred_check_branch
    %15 = sbr.rel (0) target = $region5
  $region4: #{residual_block.5} parent=0 // pred_region
    _
  $region5: #{residual_block.5} parent=0 // pred_fallthru
    _
  // Predicated region
  $region6: #{residual_block.5} parent=0 // pred_check
    _
  $region7: #{residual_block.5} parent=0 // pred_check_branch
    %17 = sbr.rel (0) target = $region9
  $region8: #{residual_block.5} parent=0 // pred_region
    _
  $region9: #{residual_block.5} parent=0 // pred_fallthru
    _
  // Predicated region
  $region10: #{residual_block.5} parent=0 // pred_check
    _
  $region11: #{residual_block.5} parent=0 // pred_check_branch
    %19 = sbr.rel (0) target = $region13
  $region12: #{residual_block.5} parent=0 // pred_region
    _
  $region13: #{residual_block.5} parent=0 // pred_fallthru
    _
  // Predicated region
  $region14: #{residual_block.5} parent=0 // pred_check
    _
  $region15: #{residual_block.5} parent=0 // pred_check_branch
    %21 = sbr.rel (0) target = $region17
  $region16: #{residual_block.5} parent=0 // pred_region
    _
  $region17: #{residual_block.5} parent=0 // pred_fallthru
    _
  // Predicated region
  $region18: #{residual_block.5} parent=0 // pred_check
    _
  $region19: #{residual_block.5} parent=0 // pred_check_branch
    %23 = sbr.rel (0) target = $region21
  $region20: #{residual_block.5} parent=0 // pred_region
    _
  $region21: #{residual_block.5} parent=0 // pred_fallthru
    _
  // Predicated region
  $region22: #{residual_block.5} parent=0 // pred_check
    _
  $region23: #{residual_block.5} parent=0 // pred_check_branch
    %25 = sbr.rel (0) target = $region25
  $region24: #{residual_block.5} parent=0 // pred_region
    _
  $region25: #{residual_block.5} parent=0 // pred_fallthru
    _
  // Predicated region
  $region26: #{residual_block.5} parent=0 // pred_check
    _
  $region27: #{residual_block.5} parent=0 // pred_check_branch
    %27 = sbr.rel (0) target = $region29
  $region28: #{residual_block.5} parent=0 // pred_region
    _
  $region29: #{residual_block.5} parent=0 // pred_fallthru
    _
  // Predicated region
  $region30: #{residual_block.5} parent=0 // pred_check
    _
  $region31: #{residual_block.5} parent=0 // pred_check_branch
    %29 = sbr.rel (0) target = $region33
  $region32: #{residual_block.5} parent=0 // pred_region
    _
  $region33: #{residual_block.5} parent=0 // pred_fallthru
    _
  // Predicated region
  $region34: #{residual_block.5} parent=0 // pred_check
    _
  $region35: #{residual_block.5} parent=0 // pred_check_branch
    %31 = sbr.rel (0) target = $region37
  $region36: #{residual_block.5} parent=0 // pred_region
    _
  $region37: #{residual_block.5} parent=0 // pred_fallthru
    _
  %v32 = vld [vmem:[%s0] sm:$0xff]
  %v33 = vld [vmem:[%s0 + $0x8] sm:$0xff]
  %v34 = vld [vmem:[%s1] sm:$0x1]
  %v36 = vperm.slane %v34, 0
  %v38 = vmul.f32 %v32, %v36
  %v39 = vmul.f32 %v33, %v36
  %v40 = vld [vmem:[%s2] sm:$0x1]
  %v42 = vperm.slane %v40, 0
  %v44 = vadd.f32 %v38, %v42
  %v45 = vadd.f32 %v39, %v42
  %v46 = vmax.f32 %v44, 0.0
  %v47 = vmax.f32 %v45, 0.0
  %v48 = vpack.c.bf16 %v47, %v46
  %v49 = vld [vmem:[%s3] sm:$0xf]
  %v50 = vld [vmem:[%s3 + $0x4] sm:$0xf]
  %v51 = vld [vmem:[%s3 + $0x8] sm:$0xf]
  %v52 = vld [vmem:[%s3 + $0xc] sm:$0xf]
  %v53 = vld [vmem:[%s3 + $0x10] sm:$0xf]
  %v54 = vld [vmem:[%s3 + $0x14] sm:$0xf]
  %v55 = vld [vmem:[%s3 + $0x18] sm:$0xf]
  %v56 = vld [vmem:[%s3 + $0x1c] sm:$0xf]
  %v57 = vld [vmem:[%s3 + $0x20] sm:$0xf]
  %v58 = vld [vmem:[%s3 + $0x24] sm:$0xf]
  %v59 = vld [vmem:[%s3 + $0x28] sm:$0xf]
  %v60 = vld [vmem:[%s3 + $0x2c] sm:$0xf]
  %v61 = vld [vmem:[%s3 + $0x30] sm:$0xf]
  %v62 = vld [vmem:[%s3 + $0x34] sm:$0xf]
  %v63 = vld [vmem:[%s3 + $0x38] sm:$0xf]
  %v64 = vld [vmem:[%s3 + $0x3c] sm:$0xf]
  %v65 = vld [vmem:[%s4] sm:$0x1]
  %v67 = vperm.slane %v65, 0
  %v85 = vunpack.c.l.b16 %v49
  %v86 = vunpack.c.l.b16 %v50
  %v87 = vunpack.c.l.b16 %v51
  %v88 = vunpack.c.l.b16 %v52
  %v89 = vunpack.c.l.b16 %v53
  %v90 = vunpack.c.l.b16 %v54
  %v91 = vunpack.c.l.b16 %v55
  %v92 = vunpack.c.l.b16 %v56
  %v93 = vunpack.c.l.b16 %v57
  %v94 = vunpack.c.l.b16 %v58
  %v95 = vunpack.c.l.b16 %v59
  %v96 = vunpack.c.l.b16 %v60
  %v97 = vunpack.c.l.b16 %v61
  %v98 = vunpack.c.l.b16 %v62
  %v99 = vunpack.c.l.b16 %v63
  %v100 = vunpack.c.l.b16 %v64
  %v101 = vpack.c.b16 %v86, %v85
  %v102 = vpack.c.b16 %v88, %v87
  %v103 = vpack.c.b16 %v90, %v89
  %v104 = vpack.c.b16 %v92, %v91
  %v105 = vpack.c.b16 %v94, %v93
  %v106 = vpack.c.b16 %v96, %v95
  %v107 = vpack.c.b16 %v98, %v97
  %v108 = vpack.c.b16 %v100, %v99
  %117 = vmatpush.bf16.msra.mxu0 %v108
  %118 = vmatpush.bf16.msra.mxu0 %v107
  %119 = vmatpush.bf16.msra.mxu0 %v106
  %120 = vmatpush.bf16.msra.mxu0 %v105
  %121 = vmatpush.bf16.msra.mxu0 %v104
  %122 = vmatpush.bf16.msra.mxu0 %v103
  %123 = vmatpush.bf16.msra.mxu0 %v102
  %124 = vmatpush.bf16.msra.mxu0 %v101
  %125 = vmatmul.bf16.gmra.mxu0 %v48
  %v126 = vpop.f32.mrf.mxu0
  %v127 = vadd.f32 %v67, %v126
  %v128 = vpop.f32.mrf.mxu0
  %v129 = vadd.f32 %v67, %v128
  %130 = vdwg.mxu0
  %v131 = vld [vmem:[%s5] sm:$0x1]
  %v133 = vperm.slane %v131, 0
  %v135 = vmul.f32 %v127, %v133
  %v136 = vmul.f32 %v129, %v133
  %v137 = vld [vmem:[%s6] sm:$0x1]
  %v139 = vperm.slane %v137, 0
  %v141 = vadd.f32 %v135, %v139
  %v142 = vadd.f32 %v136, %v139
  %v143 = vmax.f32 %v141, 0.0
  %v144 = vmax.f32 %v142, 0.0
  %v145 = vpack.c.bf16 %v144, %v143
  %v146 = vld [vmem:[%s7] sm:$0xf]
  %v147 = vld [vmem:[%s7 + $0x4] sm:$0xf]
  %v148 = vld [vmem:[%s7 + $0x8] sm:$0xf]
  %v149 = vld [vmem:[%s7 + $0xc] sm:$0xf]
  %v150 = vld [vmem:[%s7 + $0x10] sm:$0xf]
  %v151 = vld [vmem:[%s7 + $0x14] sm:$0xf]
  %v152 = vld [vmem:[%s7 + $0x18] sm:$0xf]
  %v153 = vld [vmem:[%s7 + $0x1c] sm:$0xf]
  %v154 = vld [vmem:[%s7 + $0x20] sm:$0xf]
  %v155 = vld [vmem:[%s7 + $0x24] sm:$0xf]
  %v156 = vld [vmem:[%s7 + $0x28] sm:$0xf]
  %v157 = vld [vmem:[%s7 + $0x2c] sm:$0xf]
  %v158 = vld [vmem:[%s7 + $0x30] sm:$0xf]
  %v159 = vld [vmem:[%s7 + $0x34] sm:$0xf]
  %v160 = vld [vmem:[%s7 + $0x38] sm:$0xf]
  %v161 = vld [vmem:[%s7 + $0x3c] sm:$0xf]
  %v162 = vld [vmem:[%s8] sm:$0x1]
  %v164 = vperm.slane %v162, 0
  %v182 = vunpack.c.l.b16 %v146
  %v183 = vunpack.c.l.b16 %v147
  %v184 = vunpack.c.l.b16 %v148
  %v185 = vunpack.c.l.b16 %v149
  %v186 = vunpack.c.l.b16 %v150
  %v187 = vunpack.c.l.b16 %v151
  %v188 = vunpack.c.l.b16 %v152
  %v189 = vunpack.c.l.b16 %v153
  %v190 = vunpack.c.l.b16 %v154
  %v191 = vunpack.c.l.b16 %v155
  %v192 = vunpack.c.l.b16 %v156
  %v193 = vunpack.c.l.b16 %v157
  %v194 = vunpack.c.l.b16 %v158
  %v195 = vunpack.c.l.b16 %v159
  %v196 = vunpack.c.l.b16 %v160
  %v197 = vunpack.c.l.b16 %v161
  %v198 = vpack.c.b16 %v183, %v182
  %v199 = vpack.c.b16 %v185, %v184
  %v200 = vpack.c.b16 %v187, %v186
  %v201 = vpack.c.b16 %v189, %v188
  %v202 = vpack.c.b16 %v191, %v190
  %v203 = vpack.c.b16 %v193, %v192
  %v204 = vpack.c.b16 %v195, %v194
  %v205 = vpack.c.b16 %v197, %v196
  %214 = vmatpush.bf16.msra.mxu0 %v205
  %215 = vmatpush.bf16.msra.mxu0 %v204
  %216 = vmatpush.bf16.msra.mxu0 %v203
  %217 = vmatpush.bf16.msra.mxu0 %v202
  %218 = vmatpush.bf16.msra.mxu0 %v201
  %219 = vmatpush.bf16.msra.mxu0 %v200
  %220 = vmatpush.bf16.msra.mxu0 %v199
  %221 = vmatpush.bf16.msra.mxu0 %v198
  %222 = vmatmul.bf16.gmra.mxu0 %v145
  %v223 = vpop.f32.mrf.mxu0
  %v224 = vadd.f32 %v164, %v223
  %v225 = vpop.f32.mrf.mxu0
  %v226 = vadd.f32 %v164, %v225
  %227 = vdwg.mxu0
  %v228 = vadd.f32 %v32, %v224
  %v229 = vadd.f32 %v33, %v226
  %230 = vst [vmem:[%s9] sm:$0xff] %v228
  %231 = vst [vmem:[%s9 + $0x8] sm:$0xff] %v229
  // Predicated region
  $region38: #{residual_block.5} parent=0 // pred_check
    _
  $region39: #{residual_block.5} parent=0 // pred_check_branch
    %233 = sbr.rel (0) target = $region41
  $region40: #{residual_block.5} parent=0 // pred_region
    _
  $region41: #{residual_block.5} parent=0 // pred_fallthru
    _
  // Predicated region
  $region42: #{residual_block.5} parent=0 // pred_check
    _
  $region43: #{residual_block.5} parent=0 // pred_check_branch
    %235 = sbr.rel (0) target = $region45
  $region44: #{residual_block.5} parent=0 // pred_region
    _
  $region45: #{residual_block.5} parent=0 // pred_fallthru
    _

</llo_original>
